<compile_context>
chip_gen: v5e
topology: v5e:2x2
jax: 0.10.0
libtpu: 0.0.40
codegen_flags: <defaults>
</compile_context>

<pallas_src>
import functools

import jax
import jax.numpy as jnp
from jax.experimental import pallas as pl
from jax.experimental.pallas import tpu as pltpu


def _round_up(x, m):
    return (x + m - 1) // m * m


@functools.lru_cache(maxsize=1)
def _vmem_capacity_bytes():
    """Per-TensorCore VMEM capacity; conservative (v7x) fallback if unknown."""
    try:
        return int(pltpu.get_tpu_info().vmem_capacity_bytes)
    except Exception:
        return 64 * 1024 * 1024


def _vmem_limits():
    cap = _vmem_capacity_bytes()
    # v7x (64 MiB/TC):   scoped limit 48 MiB, per-step budget 24 MiB.
    # v5e/v6e (128 MiB): scoped limit 96 MiB, per-step budget 48 MiB.
    vmem_limit = min((cap * 3) // 4, 96 * 1024 * 1024)
    budget = vmem_limit // 2
    return budget, vmem_limit


def _softmax_axis0_kernel(x_ref, o_ref):
    # x_ref / o_ref: (M, tn) block -- all rows, one lane-dense slice of cols.
    x_exp = jnp.exp(x_ref[...].astype(jnp.float32))
    total = jnp.sum(x_exp, axis=0, keepdims=True)          # (1, tn)
    # Exact divide: the kernel is memory-bound so this is hidden under DMA,
    # and it keeps per-column sums at f32 accuracy (approx recip cost ~1e-3).
    o_ref[...] = (x_exp / total).astype(o_ref.dtype)


def _softmax_axis0_ref(x):
    x_exp = jnp.exp(x.astype(jnp.float32))
    return (x_exp / jnp.sum(x_exp, axis=0, keepdims=True)).astype(x.dtype)


@functools.partial(jax.jit, static_argnames=("tn", "force_pallas"))
def softmax_axis0(x, *, tn=None, force_pallas=False):
    """Softmax over axis 0 of a 2-D array, matching the torch module."""
    M, N = x.shape
    itemsize = jnp.dtype(x.dtype).itemsize
    budget, vmem_limit = _vmem_limits()

    # Per-column VMEM cost of one grid step: double-buffered input + output
    # plus ~two f32 temporaries (x_exp and the pre-cast result).
    bytes_per_col = M * (4 * itemsize + 8)

    # Very tall M: even a 128-lane full-height tile blows the budget.
    # TODO(synk): replace with the two-pass row-tiled variant.
    if 128 * bytes_per_col > budget:
        return _softmax_axis0_ref(x)

    # Tiny inputs: launch + DMA fixed cost dominates; XLA fusion is faster.
    if not force_pallas and M * N <= 16384:
        return _softmax_axis0_ref(x)

    N_128 = _round_up(N, 128)

    if tn is None:
        # Largest lane tile the VMEM budget allows (no artificial cap).
        tn_budget = max(128, (budget // bytes_per_col) // 128 * 128)
        # Keep >= ~1 MiB of input per grid step (amortize ~0.35 us/step) ...
        tn_1mb = _round_up(pl.cdiv(1 << 20, max(M * itemsize, 1)), 128)
        # ... but prefer >= ~8 column tiles so the "parallel" axis shards
        # evenly across TensorCores (v7x) and the pipeline has depth.
        tn_split = _round_up(pl.cdiv(N, 8), 128)
        tn = min(tn_budget, N_128)
        tn = min(tn, max(tn_split, tn_1mb))
        tn = max(tn, 128)
    else:
        tn = min(max(128, _round_up(int(tn), 128)), N_128)

    grid = (pl.cdiv(N, tn),)
    cost = pl.CostEstimate(
        flops=3 * M * N,
        transcendentals=M * N,
        bytes_accessed=2 * M * N * itemsize,
    )

    # No host-side padding / slicing: the row dim uses its full extent (the
    # compiler masks the sublane padding in the reduction) and the edge column
    # tile's out-of-bounds columns are independent; their stores are masked.
    # If DMA latency is still exposed for moderate tiles, an optional lever is
    # pipeline_mode=pl.Buffered(3) on the input spec.
    return pl.pallas_call(
        _softmax_axis0_kernel,
        out_shape=jax.ShapeDtypeStruct((M, N), x.dtype),
        grid=grid,
        in_specs=[pl.BlockSpec((M, tn), lambda j: (0, j))],
        out_specs=pl.BlockSpec((M, tn), lambda j: (0, j)),
        compiler_params=pltpu.CompilerParams(
            dimension_semantics=("parallel",),
            vmem_limit_bytes=vmem_limit,
        ),
        cost_estimate=cost,
    )(x)


def softmax(x, **kwargs):
    """N-D front end matching `Softmax.forward` (reduction over dim 0)."""
    if x.ndim == 2:
        return softmax_axis0(x, **kwargs)
    lead = x.shape[0]
    out = softmax_axis0(x.reshape(lead, -1), **kwargs)
    return out.reshape(x.shape)


if __name__ == "__main__":
    key = jax.random.PRNGKey(0)
    k1, k2, k3 = jax.random.split(key, 3)

    # Shape implied by the module's usage: seq=8, hidden=32.
    x = jax.random.normal(k1, (8, 32), dtype=jnp.float32)
    out = jax.block_until_ready(softmax_axis0(x, force_pallas=True))
    ref = _softmax_axis0_ref(x)
    assert out.shape == x.shape and out.dtype == x.dtype
    assert jnp.allclose(out, ref, atol=1e-5, rtol=1e-5)
    assert jnp.allclose(jnp.sum(out, axis=0), jnp.ones((32,), jnp.float32),
                        atol=1e-4)

    # Awkward shape: non-multiple-of-8 rows and non-multiple-of-128 columns
    # (exercises the masked edge tile with no host pad / slice round-trip).
    x2 = jax.random.normal(k2, (13, 300), dtype=jnp.float32)
    out2 = jax.block_until_ready(softmax_axis0(x2, force_pallas=True))
    ref2 = _softmax_axis0_ref(x2)
    assert out2.shape == x2.shape
    assert jnp.allclose(out2, ref2, atol=1e-5, rtol=1e-5)
    assert jnp.allclose(jnp.sum(out2, axis=0), jnp.ones((300,), jnp.float32),
                        atol=1e-4)

    # Larger shape that takes the normal (auto) Pallas path.
    x3 = jax.random.normal(k3, (16, 2048), dtype=jnp.float32)
    out3 = jax.block_until_ready(softmax_axis0(x3))
    ref3 = _softmax_axis0_ref(x3)
    assert jnp.allclose(out3, ref3, atol=1e-5, rtol=1e-5)

    print("KERNEL_OK")
</pallas_src>

<mosaic_0001>
module attributes {stable_mosaic.version = 11 : i64} {
  func.func @_softmax_axis0_kernel(%arg0: i32, %arg1: memref<8x128xf32, #tpu.memory_space<vmem>>, %arg2: memref<8x128xf32, #tpu.memory_space<vmem>>) attributes {dimension_semantics = [#tpu.dimension_semantics<parallel>], iteration_bounds = array<i64: 1>, scalar_prefetch = 0 : i64, scratch_operands = 0 : i64, tpu.core_type = #tpu.core_type<tc>, window_params = [{transform_indices = @transform_0, window_bounds = array<i64: 8, 128>}, {transform_indices = @transform_1, window_bounds = array<i64: 8, 128>}]} {
    %c0 = arith.constant 0 : index
    %c0_0 = arith.constant 0 : index
    %0 = vector.load %arg1[%c0, %c0_0] : memref<8x128xf32, #tpu.memory_space<vmem>>, vector<8x128xf32>
    %1 = math.exp %0 : vector<8x128xf32>
    %cst = arith.constant dense<0.000000e+00> : vector<128xf32>
    %2 = vector.multi_reduction <add>, %1, %cst [0] : vector<8x128xf32> to vector<128xf32>
    %3 = vector.shape_cast %2 : vector<128xf32> to vector<1x128xf32>
    %4 = vector.broadcast %3 : vector<1x128xf32> to vector<8x128xf32>
    %5 = arith.divf %1, %4 : vector<8x128xf32>
    %c0_1 = arith.constant 0 : index
    %c0_2 = arith.constant 0 : index
    %6 = vector.load %arg2[%c0_1, %c0_2] : memref<8x128xf32, #tpu.memory_space<vmem>>, vector<8x128xf32>
    tpu.vector_store %arg2[%c0_1, %c0_2], %5 {strides = array<i32>} : memref<8x128xf32, #tpu.memory_space<vmem>>, vector<8x128xf32>,
    return
  }
  func.func @transform_0(%arg0: i32) -> (i32, i32) {
    %c0_i32 = arith.constant 0 : i32
    %c0_i32_0 = arith.constant 0 : i32
    return %c0_i32, %arg0 : i32, i32
  }
  func.func @transform_1(%arg0: i32) -> (i32, i32) {
    %c0_i32 = arith.constant 0 : i32
    %c0_i32_0 = arith.constant 0 : i32
    return %c0_i32, %arg0 : i32, i32
  }
}

</mosaic_0001>

<llo_original>
// kernel: softmax_axis0.1
$region0: #{softmax_axis0.1}
  #allocation0 [shape = 'u32[]', space=smem, size = 0x4, offset = 0x4, fixed_abs, tag = 'smem constant byte address 0x4 - core index']
  #allocation1 [shape = 'u32[72,128]{1,0:T(1,128)}', space=vmem, size = 0x9000, scoped, tag = 'internal scratch']
  %s0 = inlined_call_operand.hbm [shape: f32[8,32], index: 0, kind: input, shape index: {}]
  %s1 = inlined_call_operand.hbm [shape: f32[8,32], index: 1, kind: output, shape index: {}]
  %s2 = sld [smem:[#allocation0]]
  $region18: #{softmax_axis0.1} parent=0
    _
  %s4 = ssub.s32 1, %s2
  %s5 = scalar_select 0, %s4, %s2
  $region1: #{softmax_axis0.1} parent=0
    #allocation2 [shape = 'u8[4096]{0}', space=vmem, size = 0x1000, scoped, tag = 'input window, operand 0, single buffered']
    #allocation3 [shape = 's32[1]{0}', space=sflag, size = 0x4, scoped, tag = 'scoped memory for softmax_axis0.1']
    #allocation4 [shape = 's32[1]{0}', space=sflag, size = 0x4, scoped, tag = 'scoped memory for softmax_axis0.1']
    #allocation5 [shape = 'u8[4096]{0}', space=vmem, size = 0x1000, scoped, tag = 'output window, operand 0, single buffered']
    %6 = vsyncpa [#allocation3], 0
    %7 = vsyncpa [#allocation4], 0
    // Predicated region
    $region2: #{softmax_axis0.1} parent=1 // pred_check
      _
    $region3: #{softmax_axis0.1} parent=1 // pred_check_branch
      %9 = sbr.rel (0) target = $region5
    $region4: #{softmax_axis0.1} parent=1 // pred_region
      %11 = vsyncadd [#allocation3], 0
      %s13 = sshll.u32 %s0, 4
      %s14 = int_to_ptr.hbm [resolvable:$true] %s13
      %s15 = sshll.u32 [#allocation2], 4
      %s16 = int_to_ptr.vmem [resolvable:$true] %s15
      %18 = dma.hbm_to_vmem [thread:$0]  %s14, 128, %s16, [#allocation3]
    $region5: #{softmax_axis0.1} parent=1 // pred_fallthru
      _
    // Predicated region
    $region6: #{softmax_axis0.1} parent=1 // pred_check
      _
    $region7: #{softmax_axis0.1} parent=1 // pred_check_branch
      %20 = sbr.rel (0) target = $region9
    $region8: #{softmax_axis0.1} parent=1 // pred_region
      %22 = dma.done [#allocation3], 128
    $region9: #{softmax_axis0.1} parent=1 // pred_fallthru
      _
    %v23 = vld [vmem:[#allocation2] sm:$0xff]
    %v24 = vmul.f32 %v23, 1.442695
    %v25 = vpow.pop %v24
    %v26 = vrot.slane %v25, 4
    %v27 = vadd.f32 %v25, %v26
    %v28 = vrot.slane %v27, 2
    %v29 = vadd.f32 %v27, %v28
    %v30 = vrot.slane %v29, 1
    %v31 = vadd.f32 %v29, %v30
    %v32 = vrcp.pop %v31
    %v33 = vmul.f32 %v31, %v32
    %v34 = vsub.f32 1.0, %v33
    %v35 = vmul.f32 %v32, %v34
    %v36 = vadd.f32 %v32, %v35
    %vm37 = vweird.f32 %v31
    %vm38 = vweird.f32 %v32
    %vm39 = vmor %vm37, %vm38
    %v40 = vsel %vm39, %v32, %v36
    %v41 = vand.u32 2147483647, %v31
    %vm42 = vcmp.eq.f32.partialorder %v41, 8.507059e+37
    %v43 = vand.u32 %v31, 2147483648
    %v44 = vor.u32 1.1754944e-38, %v43
    %v45 = vsel %vm42, %v44, %v40
    %v46 = vmul.f32 %v25, %v45
    %47 = vst [vmem:[#allocation5] sm:$0xff] %v46
    // Predicated region
    $region10: #{softmax_axis0.1} parent=1 // pred_check
      _
    $region11: #{softmax_axis0.1} parent=1 // pred_check_branch
      %49 = sbr.rel (0) target = $region13
    $region12: #{softmax_axis0.1} parent=1 // pred_region
      %51 = vsyncadd [#allocation4], 0
      %s53 = sshll.u32 [#allocation5], 4
      %s54 = int_to_ptr.vmem [resolvable:$true] %s53
      %s55 = sshll.u32 %s1, 4
      %s56 = int_to_ptr.hbm [resolvable:$true] %s55
      %58 = dma.vmem_to_hbm [thread:$0]  %s54, 128, %s56, [#allocation4]
    $region13: #{softmax_axis0.1} parent=1 // pred_fallthru
      _
    // Predicated region
    $region14: #{softmax_axis0.1} parent=1 // pred_check
      _
    $region15: #{softmax_axis0.1} parent=1 // pred_check_branch
      %60 = sbr.rel (0) target = $region17
    $region16: #{softmax_axis0.1} parent=1 // pred_region
      %62 = dma.done [#allocation4], 128
    $region17: #{softmax_axis0.1} parent=1 // pred_fallthru
      _
    %63 = vsyncpa [#allocation3], 1
    %64 = vsyncpa [#allocation4], 1

</llo_original>
